<compile_context>
chip_gen: v7x
topology: tpu7x:2x2x1
jax: 0.10.0
libtpu: 0.0.40
codegen_flags: <defaults>
</compile_context>

<pallas_src>
import functools

import jax
import jax.numpy as jnp
from jax.experimental import pallas as pl
from jax.experimental.pallas import tpu as pltpu

_LANE = 128
_SUBLANE_BF16 = 16  # bf16 packs 16 sublanes per vreg


def _round_up(x, m):
    return (x + m - 1) // m * m


def _cdiv(a, b):
    return (a + b - 1) // b


# --------------------------------------------------------------------------
# Kernel
# --------------------------------------------------------------------------
def _autoencoder_kernel(
    x_ref,
    w1_ref, b1_ref,   # input_dim (lane-padded) -> 256
    w2_ref, b2_ref,   # 256 -> 128
    w3_ref, b3_ref,   # 128 -> encoding_dim (lane-padded)
    w4_ref, b4_ref,   # encoding_dim (lane-padded) -> 128
    w5_ref, b5_ref,   # 128 -> 256
    w6_ref, b6_ref,   # 256 -> input_dim (lane-padded)
    dec_ref, enc_ref,
):
    def dense(a_bf16, w_ref, b_ref):
        # bf16 MXU operands, f32 accumulation, f32 bias add.
        return jnp.dot(a_bf16, w_ref[...], preferred_element_type=jnp.float32) + b_ref[...]

    def relu_bf16(h_f32):
        # Cast once after the f32 bias add, ReLU in bf16: same numerics as
        # relu-then-cast, but halves vreg traffic and feeds the next MXU op
        # directly (v6e/v7x have bf16 VALUs).
        return jnp.maximum(h_f32.astype(jnp.bfloat16), 0)

    x = x_ref[...]  # already bf16

    # ----- encoder -----  (Dropout = identity in eval mode)
    h = relu_bf16(dense(x, w1_ref, b1_ref))
    h = relu_bf16(dense(h, w2_ref, b2_ref))
    enc = relu_bf16(dense(h, w3_ref, b3_ref))
    enc_ref[...] = enc.astype(enc_ref.dtype)

    # ----- decoder -----
    h = relu_bf16(dense(enc, w4_ref, b4_ref))
    h = relu_bf16(dense(h, w5_ref, b5_ref))
    dec_ref[...] = jax.nn.sigmoid(dense(h, w6_ref, b6_ref)).astype(dec_ref.dtype)


# --------------------------------------------------------------------------
# One-time parameter preparation (hoisted out of the hot path)
# --------------------------------------------------------------------------
def prepare_params(params):
    """Pad weights/biases to lane width and cast to MXU dtypes ONCE."""
    input_dim = params["w1"].shape[0]
    encoding_dim = params["w3"].shape[1]
    D = _round_up(input_dim, _LANE)
    E = _round_up(encoding_dim, _LANE)
    f32, bf16 = jnp.float32, jnp.bfloat16

    def pad2(a, rows, cols, dtype):
        a = jnp.asarray(a)
        r, c = a.shape
        return jnp.pad(a.astype(dtype), ((0, rows - r), (0, cols - c)))

    prepped = {
        "w1": pad2(params["w1"], D, 256, bf16),   "b1": pad2(params["b1"], 1, 256, f32),
        "w2": pad2(params["w2"], 256, 128, bf16), "b2": pad2(params["b2"], 1, 128, f32),
        "w3": pad2(params["w3"], 128, E, bf16),   "b3": pad2(params["b3"], 1, E, f32),
        "w4": pad2(params["w4"], E, 128, bf16),   "b4": pad2(params["b4"], 1, 128, f32),
        "w5": pad2(params["w5"], 128, 256, bf16), "b5": pad2(params["b5"], 1, 256, f32),
        "w6": pad2(params["w6"], 256, D, bf16),   "b6": pad2(params["b6"], 1, D, f32),
    }
    return prepped, input_dim, encoding_dim


def _choose_batch_tiling(B, batch_tile):
    """Pick (TB, Bp): TB multiple of 16 (bf16 sublanes), minimal padding,
    and >=2 grid steps when the batch allows it (keeps both v7x TCs busy)."""
    sub = _SUBLANE_BF16
    B16 = _round_up(B, sub)
    cap = _round_up(batch_tile, sub)
    if B16 <= cap:
        if B16 >= 2 * sub:
            TB = _round_up(_cdiv(B16, 2), sub)   # split small batches in two
        else:
            TB = B16
    else:
        n_tiles = _cdiv(B16, cap)                # minimize padded rows
        TB = _round_up(_cdiv(B16, n_tiles), sub)
    Bp = _round_up(B16, TB)
    return TB, Bp


# --------------------------------------------------------------------------
# Forward wrapper
# --------------------------------------------------------------------------
@functools.partial(jax.jit, static_argnames=("input_dim", "encoding_dim", "batch_tile"))
def anomaly_detector_forward(x, prepped, *, input_dim, encoding_dim, batch_tile=512):
    """Returns (decoded, encoded), matching the PyTorch module's forward."""
    B = x.shape[0]
    D = prepped["w1"].shape[0]   # lane-padded input_dim
    E = prepped["w3"].shape[1]   # lane-padded encoding_dim
    TB, Bp = _choose_batch_tiling(B, batch_tile)

    # Stream x as bf16 (the MXU consumes bf16 anyway) -> half the input DMA.
    xp = jnp.pad(x.astype(jnp.bfloat16), ((0, Bp - B), (0, D - input_dim)))

    weights = (prepped["w1"], prepped["b1"], prepped["w2"], prepped["b2"],
               prepped["w3"], prepped["b3"], prepped["w4"], prepped["b4"],
               prepped["w5"], prepped["b5"], prepped["w6"], prepped["b6"])

    def batch_spec(cols):
        return pl.BlockSpec((TB, cols), lambda i: (i, 0))

    def const_spec(shape):
        # Grid-invariant operand: single-buffer (constant index_map), halving
        # the weight VMEM footprint (important on v7x's 64 MiB VMEM).
        return pl.BlockSpec(shape, lambda i: (0, 0), pipeline_mode=pl.Buffered(1))

    in_specs = [batch_spec(D)] + [const_spec(w.shape) for w in weights]
    out_specs = [batch_spec(D), batch_spec(E)]

    # Advisory cost estimate for XLA's scheduler.
    layer_dims = [(D, 256), (256, 128), (128, E), (E, 128), (128, 256), (256, D)]
    weight_bytes = sum(i * o * 2 + o * 4 for i, o in layer_dims)   # bf16 W + f32 b
    flops = 2 * Bp * sum(i * o for i, o in layer_dims)
    act_bytes = Bp * (2 * D + 4 * D + 4 * E)                        # bf16 x + f32 dec/enc
    cost = pl.CostEstimate(flops=flops, transcendentals=Bp * D,
                           bytes_accessed=weight_bytes + act_bytes)

    # VMEM budget: single-buffered weights + double-buffered activation tiles
    # + headroom, capped at 56 MiB (leave slack under v7x's 64 MiB physical).
    tile_bytes = 2 * TB * (2 * D + 4 * D + 4 * E)
    vmem_limit = int(min(max(tile_bytes + weight_bytes + (8 << 20), 32 << 20),
                         56 << 20))

    dec_p, enc_p = pl.pallas_call(
        _autoencoder_kernel,
        out_shape=(
            jax.ShapeDtypeStruct((Bp, D), x.dtype),   # decoded (padded)
            jax.ShapeDtypeStruct((Bp, E), x.dtype),   # encoded (padded)
        ),
        grid_spec=pltpu.PrefetchScalarGridSpec(
            num_scalar_prefetch=0,
            grid=(Bp // TB,),
            in_specs=in_specs,
            out_specs=out_specs,
        ),
        compiler_params=pltpu.CompilerParams(
            dimension_semantics=("parallel",),   # batch tiles shard across TCs
            vmem_limit_bytes=vmem_limit,
        ),
        cost_estimate=cost,
    )(xp, *weights)

    return dec_p[:B, :input_dim], enc_p[:B, :encoding_dim]


# --------------------------------------------------------------------------
# Init + pure-JAX reference
# --------------------------------------------------------------------------
def init_params(key, input_dim, encoding_dim=64):
    """Init mirroring the PyTorch module's Linear layers.

    Weights are (in_features, out_features) f32, biases (1, out_features) f32,
    PyTorch-Linear-style uniform bounds.  prepare_params() pads/casts once.
    """
    dims = [
        (input_dim, 256),      # encoder.0
        (256, 128),            # encoder.3
        (128, encoding_dim),   # encoder.6
        (encoding_dim, 128),   # decoder.0
        (128, 256),            # decoder.3
        (256, input_dim),      # decoder.6
    ]
    params = {}
    for idx, (fan_in, fan_out) in enumerate(dims, start=1):
        key, kw, kb = jax.random.split(key, 3)
        bound = float(fan_in) ** -0.5
        params[f"w{idx}"] = jax.random.uniform(
            kw, (fan_in, fan_out), jnp.float32, minval=-bound, maxval=bound)
        params[f"b{idx}"] = jax.random.uniform(
            kb, (1, fan_out), jnp.float32, minval=-bound, maxval=bound)
    return params


def _reference_forward(x, params):
    """Pure-JAX reference with the same bf16-matmul / f32-accumulate math."""
    def dense(a, w, b):
        return jnp.dot(a.astype(jnp.bfloat16), w.astype(jnp.bfloat16),
                       preferred_element_type=jnp.float32) + b.astype(jnp.float32)

    h = jax.nn.relu(dense(x, params["w1"], params["b1"]))
    h = jax.nn.relu(dense(h, params["w2"], params["b2"]))
    enc = jax.nn.relu(dense(h, params["w3"], params["b3"]))
    h = jax.nn.relu(dense(enc, params["w4"], params["b4"]))
    h = jax.nn.relu(dense(h, params["w5"], params["b5"]))
    dec = jax.nn.sigmoid(dense(h, params["w6"], params["b6"]))
    return dec, enc


if __name__ == "__main__":
    BATCH = 8
    INPUT_DIM = 128
    ENCODING_DIM = 64

    key = jax.random.PRNGKey(0)
    key_x, key_p = jax.random.split(key)

    x = jax.random.normal(key_x, (BATCH, INPUT_DIM), jnp.float32)
    params = init_params(key_p, INPUT_DIM, ENCODING_DIM)

    # Pad + cast weights ONCE, outside the (jitted) per-call path.
    prepped, input_dim, encoding_dim = prepare_params(params)

    decoded, encoded = anomaly_detector_forward(
        x, prepped, input_dim=input_dim, encoding_dim=encoding_dim)
    jax.block_until_ready((decoded, encoded))

    # Sanity check against the pure-JAX reference (same bf16 matmul math;
    # encoded may differ by bf16 rounding of the bottleneck activations).
    ref_dec, ref_enc = _reference_forward(x, params)
    assert decoded.shape == (BATCH, INPUT_DIM)
    assert encoded.shape == (BATCH, ENCODING_DIM)
    assert jnp.allclose(decoded, ref_dec, atol=2e-2, rtol=2e-2)
    assert jnp.allclose(encoded, ref_enc, atol=2e-2, rtol=2e-2)

    print("KERNEL_OK")
</pallas_src>

<mosaic_0001>
module attributes {stable_mosaic.version = 11 : i64} {
  func.func @_autoencoder_kernel(%arg0: i32, %arg1: memref<16x128xbf16, #tpu.memory_space<vmem>>, %arg2: memref<128x256xbf16, #tpu.memory_space<vmem>>, %arg3: memref<1x256xf32, #tpu.memory_space<vmem>>, %arg4: memref<256x128xbf16, #tpu.memory_space<vmem>>, %arg5: memref<1x128xf32, #tpu.memory_space<vmem>>, %arg6: memref<128x128xbf16, #tpu.memory_space<vmem>>, %arg7: memref<1x128xf32, #tpu.memory_space<vmem>>, %arg8: memref<128x128xbf16, #tpu.memory_space<vmem>>, %arg9: memref<1x128xf32, #tpu.memory_space<vmem>>, %arg10: memref<128x256xbf16, #tpu.memory_space<vmem>>, %arg11: memref<1x256xf32, #tpu.memory_space<vmem>>, %arg12: memref<256x128xbf16, #tpu.memory_space<vmem>>, %arg13: memref<1x128xf32, #tpu.memory_space<vmem>>, %arg14: memref<16x128xf32, #tpu.memory_space<vmem>>, %arg15: memref<16x128xf32, #tpu.memory_space<vmem>>) attributes {dimension_semantics = [#tpu.dimension_semantics<parallel>], iteration_bounds = array<i64: 1>, scalar_prefetch = 0 : i64, scratch_operands = 0 : i64, tpu.core_type = #tpu.core_type<tc>, window_params = [{transform_indices = @transform_0, window_bounds = array<i64: 16, 128>}, {pipeline_mode = #tpu.pipeline_mode<synchronous>, transform_indices = @transform_1, window_bounds = array<i64: 128, 256>}, {pipeline_mode = #tpu.pipeline_mode<synchronous>, transform_indices = @transform_2, window_bounds = array<i64: 1, 256>}, {pipeline_mode = #tpu.pipeline_mode<synchronous>, transform_indices = @transform_3, window_bounds = array<i64: 256, 128>}, {pipeline_mode = #tpu.pipeline_mode<synchronous>, transform_indices = @transform_4, window_bounds = array<i64: 1, 128>}, {pipeline_mode = #tpu.pipeline_mode<synchronous>, transform_indices = @transform_5, window_bounds = array<i64: 128, 128>}, {pipeline_mode = #tpu.pipeline_mode<synchronous>, transform_indices = @transform_6, window_bounds = array<i64: 1, 128>}, {pipeline_mode = #tpu.pipeline_mode<synchronous>, transform_indices = @transform_7, window_bounds = array<i64: 128, 128>}, {pipeline_mode = #tpu.pipeline_mode<synchronous>, transform_indices = @transform_8, window_bounds = array<i64: 1, 128>}, {pipeline_mode = #tpu.pipeline_mode<synchronous>, transform_indices = @transform_9, window_bounds = array<i64: 128, 256>}, {pipeline_mode = #tpu.pipeline_mode<synchronous>, transform_indices = @transform_10, window_bounds = array<i64: 1, 256>}, {pipeline_mode = #tpu.pipeline_mode<synchronous>, transform_indices = @transform_11, window_bounds = array<i64: 256, 128>}, {pipeline_mode = #tpu.pipeline_mode<synchronous>, transform_indices = @transform_12, window_bounds = array<i64: 1, 128>}, {transform_indices = @transform_13, window_bounds = array<i64: 16, 128>}, {transform_indices = @transform_14, window_bounds = array<i64: 16, 128>}]} {
    %c0 = arith.constant 0 : index
    %c0_0 = arith.constant 0 : index
    %0 = vector.load %arg1[%c0, %c0_0] : memref<16x128xbf16, #tpu.memory_space<vmem>>, vector<16x128xbf16>
    %c0_1 = arith.constant 0 : index
    %c0_2 = arith.constant 0 : index
    %1 = vector.load %arg2[%c0_1, %c0_2] : memref<128x256xbf16, #tpu.memory_space<vmem>>, vector<128x256xbf16>
    %cst = arith.constant dense<0.000000e+00> : vector<16x256xf32>
    %2 = tpu.matmul %0, %1, %cst {dimension_numbers = #tpu.dot_dimension_numbers<[1], [0], [0], [1], [0, 0, 1, 1], [], []>} : vector<16x128xbf16>, vector<128x256xbf16>, vector<16x256xf32> -> vector<16x256xf32>
    %c0_3 = arith.constant 0 : index
    %c0_4 = arith.constant 0 : index
    %3 = vector.load %arg3[%c0_3, %c0_4] : memref<1x256xf32, #tpu.memory_space<vmem>>, vector<1x256xf32>
    %4 = vector.broadcast %3 : vector<1x256xf32> to vector<16x256xf32>
    %5 = arith.addf %2, %4 : vector<16x256xf32>
    %6 = arith.truncf %5 : vector<16x256xf32> to vector<16x256xbf16>
    %cst_5 = arith.constant 0.000000e+00 : bf16
    %7 = vector.broadcast %cst_5 : bf16 to vector<16x256xbf16>
    %8 = arith.maximumf %6, %7 : vector<16x256xbf16>
    %c0_6 = arith.constant 0 : index
    %c0_7 = arith.constant 0 : index
    %9 = vector.load %arg4[%c0_6, %c0_7] : memref<256x128xbf16, #tpu.memory_space<vmem>>, vector<256x128xbf16>
    %cst_8 = arith.constant dense<0.000000e+00> : vector<16x128xf32>
    %10 = tpu.matmul %8, %9, %cst_8 {dimension_numbers = #tpu.dot_dimension_numbers<[1], [0], [0], [1], [0, 0, 1, 1], [], []>} : vector<16x256xbf16>, vector<256x128xbf16>, vector<16x128xf32> -> vector<16x128xf32>
    %c0_9 = arith.constant 0 : index
    %c0_10 = arith.constant 0 : index
    %11 = vector.load %arg5[%c0_9, %c0_10] : memref<1x128xf32, #tpu.memory_space<vmem>>, vector<1x128xf32>
    %12 = vector.broadcast %11 : vector<1x128xf32> to vector<16x128xf32>
    %13 = arith.addf %10, %12 : vector<16x128xf32>
    %14 = arith.truncf %13 : vector<16x128xf32> to vector<16x128xbf16>
    %cst_11 = arith.constant 0.000000e+00 : bf16
    %15 = vector.broadcast %cst_11 : bf16 to vector<16x128xbf16>
    %16 = arith.maximumf %14, %15 : vector<16x128xbf16>
    %c0_12 = arith.constant 0 : index
    %c0_13 = arith.constant 0 : index
    %17 = vector.load %arg6[%c0_12, %c0_13] : memref<128x128xbf16, #tpu.memory_space<vmem>>, vector<128x128xbf16>
    %cst_14 = arith.constant dense<0.000000e+00> : vector<16x128xf32>
    %18 = tpu.matmul %16, %17, %cst_14 {dimension_numbers = #tpu.dot_dimension_numbers<[1], [0], [0], [1], [0, 0, 1, 1], [], []>} : vector<16x128xbf16>, vector<128x128xbf16>, vector<16x128xf32> -> vector<16x128xf32>
    %c0_15 = arith.constant 0 : index
    %c0_16 = arith.constant 0 : index
    %19 = vector.load %arg7[%c0_15, %c0_16] : memref<1x128xf32, #tpu.memory_space<vmem>>, vector<1x128xf32>
    %20 = vector.broadcast %19 : vector<1x128xf32> to vector<16x128xf32>
    %21 = arith.addf %18, %20 : vector<16x128xf32>
    %22 = arith.truncf %21 : vector<16x128xf32> to vector<16x128xbf16>
    %cst_17 = arith.constant 0.000000e+00 : bf16
    %23 = vector.broadcast %cst_17 : bf16 to vector<16x128xbf16>
    %24 = arith.maximumf %22, %23 : vector<16x128xbf16>
    %25 = arith.extf %24 : vector<16x128xbf16> to vector<16x128xf32>
    %c0_18 = arith.constant 0 : index
    %c0_19 = arith.constant 0 : index
    %26 = vector.load %arg15[%c0_18, %c0_19] : memref<16x128xf32, #tpu.memory_space<vmem>>, vector<16x128xf32>
    tpu.vector_store %arg15[%c0_18, %c0_19], %25 {strides = array<i32>} : memref<16x128xf32, #tpu.memory_space<vmem>>, vector<16x128xf32>,
    %c0_20 = arith.constant 0 : index
    %c0_21 = arith.constant 0 : index
    %27 = vector.load %arg8[%c0_20, %c0_21] : memref<128x128xbf16, #tpu.memory_space<vmem>>, vector<128x128xbf16>
    %cst_22 = arith.constant dense<0.000000e+00> : vector<16x128xf32>
    %28 = tpu.matmul %24, %27, %cst_22 {dimension_numbers = #tpu.dot_dimension_numbers<[1], [0], [0], [1], [0, 0, 1, 1], [], []>} : vector<16x128xbf16>, vector<128x128xbf16>, vector<16x128xf32> -> vector<16x128xf32>
    %c0_23 = arith.constant 0 : index
    %c0_24 = arith.constant 0 : index
    %29 = vector.load %arg9[%c0_23, %c0_24] : memref<1x128xf32, #tpu.memory_space<vmem>>, vector<1x128xf32>
    %30 = vector.broadcast %29 : vector<1x128xf32> to vector<16x128xf32>
    %31 = arith.addf %28, %30 : vector<16x128xf32>
    %32 = arith.truncf %31 : vector<16x128xf32> to vector<16x128xbf16>
    %cst_25 = arith.constant 0.000000e+00 : bf16
    %33 = vector.broadcast %cst_25 : bf16 to vector<16x128xbf16>
    %34 = arith.maximumf %32, %33 : vector<16x128xbf16>
    %c0_26 = arith.constant 0 : index
    %c0_27 = arith.constant 0 : index
    %35 = vector.load %arg10[%c0_26, %c0_27] : memref<128x256xbf16, #tpu.memory_space<vmem>>, vector<128x256xbf16>
    %cst_28 = arith.constant dense<0.000000e+00> : vector<16x256xf32>
    %36 = tpu.matmul %34, %35, %cst_28 {dimension_numbers = #tpu.dot_dimension_numbers<[1], [0], [0], [1], [0, 0, 1, 1], [], []>} : vector<16x128xbf16>, vector<128x256xbf16>, vector<16x256xf32> -> vector<16x256xf32>
    %c0_29 = arith.constant 0 : index
    %c0_30 = arith.constant 0 : index
    %37 = vector.load %arg11[%c0_29, %c0_30] : memref<1x256xf32, #tpu.memory_space<vmem>>, vector<1x256xf32>
    %38 = vector.broadcast %37 : vector<1x256xf32> to vector<16x256xf32>
    %39 = arith.addf %36, %38 : vector<16x256xf32>
    %40 = arith.truncf %39 : vector<16x256xf32> to vector<16x256xbf16>
    %cst_31 = arith.constant 0.000000e+00 : bf16
    %41 = vector.broadcast %cst_31 : bf16 to vector<16x256xbf16>
    %42 = arith.maximumf %40, %41 : vector<16x256xbf16>
    %c0_32 = arith.constant 0 : index
    %c0_33 = arith.constant 0 : index
    %43 = vector.load %arg12[%c0_32, %c0_33] : memref<256x128xbf16, #tpu.memory_space<vmem>>, vector<256x128xbf16>
    %cst_34 = arith.constant dense<0.000000e+00> : vector<16x128xf32>
    %44 = tpu.matmul %42, %43, %cst_34 {dimension_numbers = #tpu.dot_dimension_numbers<[1], [0], [0], [1], [0, 0, 1, 1], [], []>} : vector<16x256xbf16>, vector<256x128xbf16>, vector<16x128xf32> -> vector<16x128xf32>
    %c0_35 = arith.constant 0 : index
    %c0_36 = arith.constant 0 : index
    %45 = vector.load %arg13[%c0_35, %c0_36] : memref<1x128xf32, #tpu.memory_space<vmem>>, vector<1x128xf32>
    %46 = vector.broadcast %45 : vector<1x128xf32> to vector<16x128xf32>
    %47 = arith.addf %44, %46 : vector<16x128xf32>
    %48 = arith.negf %47 : vector<16x128xf32>
    %49 = math.exp %48 : vector<16x128xf32>
    %cst_37 = arith.constant 1.000000e+00 : f32
    %50 = vector.broadcast %cst_37 : f32 to vector<16x128xf32>
    %51 = arith.addf %50, %49 : vector<16x128xf32>
    %52 = arith.divf %50, %51 : vector<16x128xf32>
    %c0_38 = arith.constant 0 : index
    %c0_39 = arith.constant 0 : index
    %53 = vector.load %arg14[%c0_38, %c0_39] : memref<16x128xf32, #tpu.memory_space<vmem>>, vector<16x128xf32>
    tpu.vector_store %arg14[%c0_38, %c0_39], %52 {strides = array<i32>} : memref<16x128xf32, #tpu.memory_space<vmem>>, vector<16x128xf32>,
    return
  }
  func.func @transform_0(%arg0: i32) -> (i32, i32) {
    %c0_i32 = arith.constant 0 : i32
    %c0_i32_0 = arith.constant 0 : i32
    return %arg0, %c0_i32 : i32, i32
  }
  func.func @transform_1(%arg0: i32) -> (i32, i32) {
    %c0_i32 = arith.constant 0 : i32
    %c0_i32_0 = arith.constant 0 : i32
    %c0_i32_1 = arith.constant 0 : i32
    return %c0_i32, %c0_i32_0 : i32, i32
  }
  func.func @transform_2(%arg0: i32) -> (i32, i32) {
    %c0_i32 = arith.constant 0 : i32
    %c0_i32_0 = arith.constant 0 : i32
    %c0_i32_1 = arith.constant 0 : i32
    return %c0_i32, %c0_i32_0 : i32, i32
  }
  func.func @transform_3(%arg0: i32) -> (i32, i32) {
    %c0_i32 = arith.constant 0 : i32
    %c0_i32_0 = arith.constant 0 : i32
    %c0_i32_1 = arith.constant 0 : i32
    return %c0_i32, %c0_i32_0 : i32, i32
  }
  func.func @transform_4(%arg0: i32) -> (i32, i32) {
    %c0_i32 = arith.constant 0 : i32
    %c0_i32_0 = arith.constant 0 : i32
    %c0_i32_1 = arith.constant 0 : i32
    return %c0_i32, %c0_i32_0 : i32, i32
  }
  func.func @transform_5(%arg0: i32) -> (i32, i32) {
    %c0_i32 = arith.constant 0 : i32
    %c0_i32_0 = arith.constant 0 : i32
    %c0_i32_1 = arith.constant 0 : i32
    return %c0_i32, %c0_i32_0 : i32, i32
  }
  func.func @transform_6(%arg0: i32) -> (i32, i32) {
    %c0_i32 = arith.constant 0 : i32
    %c0_i32_0 = arith.constant 0 : i32
    %c0_i32_1 = arith.constant 0 : i32
    return %c0_i32, %c0_i32_0 : i32, i32
  }
  func.func @transform_7(%arg0: i32) -> (i32, i32) {
    %c0_i32 = arith.constant 0 : i32
    %c0_i32_0 = arith.constant 0 : i32
    %c0_i32_1 = arith.constant 0 : i32
    return %c0_i32, %c0_i32_0 : i32, i32
  }
  func.func @transform_8(%arg0: i32) -> (i32, i32) {
    %c0_i32 = arith.constant 0 : i32
    %c0_i32_0 = arith.constant 0 : i32
    %c0_i32_1 = arith.constant 0 : i32
    return %c0_i32, %c0_i32_0 : i32, i32
  }
  func.func @transform_9(%arg0: i32) -> (i32, i32) {
    %c0_i32 = arith.constant 0 : i32
    %c0_i32_0 = arith.constant 0 : i32
    %c0_i32_1 = arith.constant 0 : i32
    return %c0_i32, %c0_i32_0 : i32, i32
  }
  func.func @transform_10(%arg0: i32) -> (i32, i32) {
    %c0_i32 = arith.constant 0 : i32
    %c0_i32_0 = arith.constant 0 : i32
    %c0_i32_1 = arith.constant 0 : i32
    return %c0_i32, %c0_i32_0 : i32, i32
  }
  func.func @transform_11(%arg0: i32) -> (i32, i32) {
    %c0_i32 = arith.constant 0 : i32
    %c0_i32_0 = arith.constant 0 : i32
    %c0_i32_1 = arith.constant 0 : i32
    return %c0_i32, %c0_i32_0 : i32, i32
  }
  func.func @transform_12(%arg0: i32) -> (i32, i32) {
    %c0_i32 = arith.constant 0 : i32
    %c0_i32_0 = arith.constant 0 : i32
    %c0_i32_1 = arith.constant 0 : i32
    return %c0_i32, %c0_i32_0 : i32, i32
  }
  func.func @transform_13(%arg0: i32) -> (i32, i32) {
    %c0_i32 = arith.constant 0 : i32
    %c0_i32_0 = arith.constant 0 : i32
    return %arg0, %c0_i32 : i32, i32
  }
  func.func @transform_14(%arg0: i32) -> (i32, i32) {
    %c0_i32 = arith.constant 0 : i32
    %c0_i32_0 = arith.constant 0 : i32
    return %arg0, %c0_i32 : i32, i32
  }
}

</mosaic_0001>

<llo_original>
// kernel: anomaly_detector_forward.1
$region0: #{anomaly_detector_forward.1}
  #allocation0 [shape = 'u32[]', space=smem, size = 0x4, offset = 0x4, fixed_abs, tag = 'smem constant byte address 0x4 - core index']
  #allocation1 [shape = 'u32[144,128]{1,0:T(1,128)}', space=vmem, size = 0x12000, scoped, tag = 'internal scratch']
  %s0 = inlined_call_operand.vmem [shape: bf16[16,128], index: 0, kind: input, shape index: {}]
  %s1 = inlined_call_operand.hbm [shape: bf16[128,256], index: 1, kind: input, shape index: {}]
  %s2 = inlined_call_operand.vmem [shape: f32[1,256], index: 2, kind: input, shape index: {}]
  %s3 = inlined_call_operand.hbm [shape: bf16[256,128], index: 3, kind: input, shape index: {}]
  %s4 = inlined_call_operand.vmem [shape: f32[1,128], index: 4, kind: input, shape index: {}]
  %s5 = inlined_call_operand.hbm [shape: bf16[128,128], index: 5, kind: input, shape index: {}]
  %s6 = inlined_call_operand.vmem [shape: f32[1,128], index: 6, kind: input, shape index: {}]
  %s7 = inlined_call_operand.hbm [shape: bf16[128,128], index: 7, kind: input, shape index: {}]
  %s8 = inlined_call_operand.vmem [shape: f32[1,128], index: 8, kind: input, shape index: {}]
  %s9 = inlined_call_operand.hbm [shape: bf16[128,256], index: 9, kind: input, shape index: {}]
  %s10 = inlined_call_operand.vmem [shape: f32[1,256], index: 10, kind: input, shape index: {}]
  %s11 = inlined_call_operand.hbm [shape: bf16[256,128], index: 11, kind: input, shape index: {}]
  %s12 = inlined_call_operand.vmem [shape: f32[1,128], index: 12, kind: input, shape index: {}]
  %s13 = inlined_call_operand.vmem [shape: f32[16,128], index: 13, kind: output, shape index: {0}]
  %s14 = inlined_call_operand.vmem [shape: f32[16,128], index: 14, kind: output, shape index: {1}]
  %15 = xla_tuple %s13, %s14
  %s16 = sld [smem:[#allocation0]]
  $region94: #{anomaly_detector_forward.1} parent=0
    _
  %s18 = ssub.s32 1, %s16
  %s19 = scalar_select 0, %s18, %s16
  $region1: #{anomaly_detector_forward.1} parent=0
    #allocation2 [shape = 'u8[65536]{0}', space=vmem, size = 0x10000, scoped, tag = 'input window, operand 1, single buffered']
    #allocation3 [shape = 's32[1]{0}', space=sflag, size = 0x4, scoped, tag = 'scoped memory for anomaly_detector_forward.1']
    #allocation4 [shape = 'u8[65536]{0}', space=vmem, size = 0x10000, scoped, tag = 'input window, operand 3, single buffered']
    #allocation5 [shape = 's32[1]{0}', space=sflag, size = 0x4, scoped, tag = 'scoped memory for anomaly_detector_forward.1']
    #allocation6 [shape = 'u8[32768]{0}', space=vmem, size = 0x8000, scoped, tag = 'input window, operand 5, single buffered']
    #allocation7 [shape = 'u8[32768]{0}', space=vmem, size = 0x8000, scoped, tag = 'input window, operand 7, single buffered']
    #allocation8 [shape = 's32[1]{0}', space=sflag, size = 0x4, scoped, tag = 'scoped memory for anomaly_detector_forward.1']
    #allocation9 [shape = 'u8[65536]{0}', space=vmem, size = 0x10000, scoped, tag = 'input window, operand 9, single buffered']
    #allocation10 [shape = 'u8[65536]{0}', space=vmem, size = 0x10000, scoped, tag = 'input window, operand 11, single buffered']
    #allocation11 [shape = 's32[1]{0}', space=sflag, size = 0x4, scoped, tag = 'scoped memory for anomaly_detector_forward.1']
    %20 = vsyncpa [#allocation3], 0
    %21 = vsyncpa [#allocation5], 0
    %22 = vsyncpa [#allocation8], 0
    %23 = vsyncpa [#allocation11], 0
    // Predicated region
    $region2: #{anomaly_detector_forward.1} parent=1 // pred_check
      _
    $region3: #{anomaly_detector_forward.1} parent=1 // pred_check_branch
      %25 = sbr.rel (0) target = $region5
    $region4: #{anomaly_detector_forward.1} parent=1 // pred_region
      _
    $region5: #{anomaly_detector_forward.1} parent=1 // pred_fallthru
      _
    // Predicated region
    $region6: #{anomaly_detector_forward.1} parent=1 // pred_check
      _
    $region7: #{anomaly_detector_forward.1} parent=1 // pred_check_branch
      %27 = sbr.rel (0) target = $region9
    $region8: #{anomaly_detector_forward.1} parent=1 // pred_region
      %s29 = ssub.s32 2048, 2048
      %30 = vsyncadd [#allocation3], %s29
      %s31 = sshll.u32 [#allocation2], 4
      %s32 = int_to_ptr.vmem [resolvable:$true] %s31
      %37 = dma.hbm_to_vmem [thread:$0]  %s1, 2048, %s32, [#allocation3], 128, 128, 8
    $region9: #{anomaly_detector_forward.1} parent=1 // pred_fallthru
      _
    // Predicated region
    $region10: #{anomaly_detector_forward.1} parent=1 // pred_check
      _
    $region11: #{anomaly_detector_forward.1} parent=1 // pred_check_branch
      %39 = sbr.rel (0) target = $region13
    $region12: #{anomaly_detector_forward.1} parent=1 // pred_region
      _
    $region13: #{anomaly_detector_forward.1} parent=1 // pred_fallthru
      _
    // Predicated region
    $region14: #{anomaly_detector_forward.1} parent=1 // pred_check
      _
    $region15: #{anomaly_detector_forward.1} parent=1 // pred_check_branch
      %41 = sbr.rel (0) target = $region17
    $region16: #{anomaly_detector_forward.1} parent=1 // pred_region
      %s43 = ssub.s32 2048, 2048
      %44 = vsyncadd [#allocation5], %s43
      %s45 = sshll.u32 [#allocation4], 4
      %s46 = int_to_ptr.vmem [resolvable:$true] %s45
      %51 = dma.hbm_to_vmem [thread:$0]  %s3, 2048, %s46, [#allocation5], 64, 64, 4
    $region17: #{anomaly_detector_forward.1} parent=1 // pred_fallthru
      _
    // Predicated region
    $region18: #{anomaly_detector_forward.1} parent=1 // pred_check
      _
    $region19: #{anomaly_detector_forward.1} parent=1 // pred_check_branch
      %53 = sbr.rel (0) target = $region21
    $region20: #{anomaly_detector_forward.1} parent=1 // pred_region
      _
    $region21: #{anomaly_detector_forward.1} parent=1 // pred_fallthru
      _
    // Predicated region
    $region22: #{anomaly_detector_forward.1} parent=1 // pred_check
      _
    $region23: #{anomaly_detector_forward.1} parent=1 // pred_check_branch
      %55 = sbr.rel (0) target = $region25
    $region24: #{anomaly_detector_forward.1} parent=1 // pred_region
      %s57 = ssub.s32 1024, 1024
      %58 = vsyncadd [#allocation5], %s57
      %s59 = sshll.u32 [#allocation6], 4
      %s60 = int_to_ptr.vmem [resolvable:$true] %s59
      %65 = dma.hbm_to_vmem [thread:$0]  %s5, 1024, %s60, [#allocation5], 64, 64, 4
    $region25: #{anomaly_detector_forward.1} parent=1 // pred_fallthru
      _
    // Predicated region
    $region26: #{anomaly_detector_forward.1} parent=1 // pred_check
      _
    $region27: #{anomaly_detector_forward.1} parent=1 // pred_check_branch
      %67 = sbr.rel (0) target = $region29
    $region28: #{anomaly_detector_forward.1} parent=1 // pred_region
      _
    $region29: #{anomaly_detector_forward.1} parent=1 // pred_fallthru
      _
    // Predicated region
    $region30: #{anomaly_detector_forward.1} parent=1 // pred_check
      _
    $region31: #{anomaly_detector_forward.1} parent=1 // pred_check_branch
      %69 = sbr.rel (0) target = $region33
    $region32: #{anomaly_detector_forward.1} parent=1 // pred_region
      %s71 = ssub.s32 1024, 1024
      %72 = vsyncadd [#allocation8], %s71
      %s73 = sshll.u32 [#allocation7], 4
      %s74 = int_to_ptr.vmem [resolvable:$true] %s73
      %79 = dma.hbm_to_vmem [thread:$0]  %s7, 1024, %s74, [#allocation8], 64, 64, 4
    $region33: #{anomaly_detector_forward.1} parent=1 // pred_fallthru
      _
    // Predicated region
    $region34: #{anomaly_detector_forward.1} parent=1 // pred_check
      _
    $region35: #{anomaly_detector_forward.1} parent=1 // pred_check_branch
      %81 = sbr.rel (0) target = $region37
    $region36: #{anomaly_detector_forward.1} parent=1 // pred_region
      _
    $region37: #{anomaly_detector_forward.1} parent=1 // pred_fallthru
      _
    // Predicated region
    $region38: #{anomaly_detector_forward.1} parent=1 // pred_check
      _
    $region39: #{anomaly_detector_forward.1} parent=1 // pred_check_branch
      %83 = sbr.rel (0) target = $region41
    $region40: #{anomaly_detector_forward.1} parent=1 // pred_region
      %s85 = ssub.s32 2048, 2048
      %86 = vsyncadd [#allocation8], %s85
      %s87 = sshll.u32 [#allocation9], 4
      %s88 = int_to_ptr.vmem [resolvable:$true] %s87
      %93 = dma.hbm_to_vmem [thread:$0]  %s9, 2048, %s88, [#allocation8], 128, 128, 8
    $region41: #{anomaly_detector_forward.1} parent=1 // pred_fallthru
      _
    // Predicated region
    $region42: #{anomaly_detector_forward.1} parent=1 // pred_check
      _
    $region43: #{anomaly_detector_forward.1} parent=1 // pred_check_branch
      %95 = sbr.rel (0) target = $region45
    $region44: #{anomaly_detector_forward.1} parent=1 // pred_region
      _
    $region45: #{anomaly_detector_forward.1} parent=1 // pred_fallthru
      _
    // Predicated region
    $region46: #{anomaly_detector_forward.1} parent=1 // pred_check
      _
    $region47: #{anomaly_detector_forward.1} parent=1 // pred_check_branch
      %97 = sbr.rel (0) target = $region49
    $region48: #{anomaly_detector_forward.1} parent=1 // pred_region
      %s99 = ssub.s32 2048, 2048
      %100 = vsyncadd [#allocation11], %s99
      %s101 = sshll.u32 [#allocation10], 4
      %s102 = int_to_ptr.vmem [resolvable:$true] %s101
      %107 = dma.hbm_to_vmem [thread:$0]  %s11, 2048, %s102, [#allocation11], 64, 64, 4
    $region49: #{anomaly_detector_forward.1} parent=1 // pred_fallthru
      _
    // Predicated region
    $region50: #{anomaly_detector_forward.1} parent=1 // pred_check
      _
    $region51: #{anomaly_detector_forward.1} parent=1 // pred_check_branch
      %109 = sbr.rel (0) target = $region53
    $region52: #{anomaly_detector_forward.1} parent=1 // pred_region
      _
    $region53: #{anomaly_detector_forward.1} parent=1 // pred_fallthru
      _
    // Predicated region
    $region54: #{anomaly_detector_forward.1} parent=1 // pred_check
      _
    $region55: #{anomaly_detector_forward.1} parent=1 // pred_check_branch
      %111 = sbr.rel (0) target = $region57
    $region56: #{anomaly_detector_forward.1} parent=1 // pred_region
      %112 = dma.done [#allocation3], 2048
    $region57: #{anomaly_detector_forward.1} parent=1 // pred_fallthru
      _
    // Predicated region
    $region58: #{anomaly_detector_forward.1} parent=1 // pred_check
      _
    $region59: #{anomaly_detector_forward.1} parent=1 // pred_check_branch
      %114 = sbr.rel (0) target = $region61
    $region60: #{anomaly_detector_forward.1} parent=1 // pred_region
      %115 = dma.done [#allocation5], 2048
    $region61: #{anomaly_detector_forward.1} parent=1 // pred_fallthru
      _
    // Predicated region
    $region62: #{anomaly_detector_forward.1} parent=1 // pred_check
      _
    $region63: #{anomaly_detector_forward.1} parent=1 // pred_check_branch
      %117 = sbr.rel (0) target = $region65
    $region64: #{anomaly_detector_forward.1} parent=1 // pred_region
      %118 = dma.done [#allocation5], 1024
    $region65: #{anomaly_detector_forward.1} parent=1 // pred_fallthru
      _
    // Predicated region
    $region66: #{anomaly_detector_forward.1} parent=1 // pred_check
      _
    $region67: #{anomaly_detector_forward.1} parent=1 // pred_check_branch
      %120 = sbr.rel (0) target = $region69
    $region68: #{anomaly_detector_forward.1} parent=1 // pred_region
      %121 = dma.done [#allocation8], 1024
    $region69: #{anomaly_detector_forward.1} parent=1 // pred_fallthru
      _
    // Predicated region
    $region70: #{anomaly_detector_forward.1} parent=1 // pred_check
      _
    $region71: #{anomaly_detector_forward.1} parent=1 // pred_check_branch
      %123 = sbr.rel (0) target = $region73
    $region72: #{anomaly_detector_forward.1} parent=1 // pred_region
      %124 = dma.done [#allocation8], 2048
    $region73: #{anomaly_detector_forward.1} parent=1 // pred_fallthru
      _
    // Predicated region
    $region74: #{anomaly_detector_forward.1} parent=1 // pred_check
      _
    $region75: #{anomaly_detector_forward.1} parent=1 // pred_check_branch
      %126 = sbr.rel (0) target = $region77
    $region76: #{anomaly_detector_forward.1} parent=1 // pred_region
      %127 = dma.done [#allocation11], 2048
    $region77: #{anomaly_detector_forward.1} parent=1 // pred_fallthru
      _
    %v129 = vld [vmem:[%s0] sm:$0xf]
    %v130 = vld [vmem:[%s0 + $0x4] sm:$0xf]
    %v131 = vld [vmem:[#allocation2] sm:$0xff]
    %v132 = vld [vmem:[#allocation2 + $0x8] sm:$0xff]
    %v133 = vld [vmem:[#allocation2 + $0x10] sm:$0xff]
    %v134 = vld [vmem:[#allocation2 + $0x18] sm:$0xff]
    %v135 = vld [vmem:[#allocation2 + $0x20] sm:$0xff]
    %v136 = vld [vmem:[#allocation2 + $0x28] sm:$0xff]
    %v137 = vld [vmem:[#allocation2 + $0x30] sm:$0xff]
    %v138 = vld [vmem:[#allocation2 + $0x38] sm:$0xff]
    %v139 = vld [vmem:[#allocation2 + $0x40] sm:$0xff]
    %v140 = vld [vmem:[#allocation2 + $0x48] sm:$0xff]
    %v141 = vld [vmem:[#allocation2 + $0x50] sm:$0xff]
    %v142 = vld [vmem:[#allocation2 + $0x58] sm:$0xff]
    %v143 = vld [vmem:[#allocation2 + $0x60] sm:$0xff]
    %v144 = vld [vmem:[#allocation2 + $0x68] sm:$0xff]
    %v145 = vld [vmem:[#allocation2 + $0x70] sm:$0xff]
    %v146 = vld [vmem:[#allocation2 + $0x78] sm:$0xff]
    %v147 = vld [vmem:[%s2] sm:$0x3]
    %v149 = vlaneseq
    %v150 = vshrl.u32 %v149, 7
    %v151 = vsub.s32 0, %v150
    %v152 = vrot.slane %v147, %v151
    %v153 = vlaneseq
    %v154 = vshrl.u32 %v153, 7
    %v155 = vsub.s32 1, %v154
    %v156 = vrot.slane %v147, %v155
    %v161 = vunpack.c.l.b16 %v129
    %v162 = vunpack.c.l.b16 %v130
    %v163 = vpack.c.b16 %v162, %v161
    %v181 = vunpack.c.l.b16 %v131
    %v182 = vunpack.c.h.b16 %v131
    %v183 = vunpack.c.l.b16 %v132
    %v184 = vunpack.c.h.b16 %v132
    %v185 = vunpack.c.l.b16 %v133
    %v186 = vunpack.c.h.b16 %v133
    %v187 = vunpack.c.l.b16 %v134
    %v188 = vunpack.c.h.b16 %v134
    %v189 = vunpack.c.l.b16 %v135
    %v190 = vunpack.c.h.b16 %v135
    %v191 = vunpack.c.l.b16 %v136
    %v192 = vunpack.c.h.b16 %v136
    %v193 = vunpack.c.l.b16 %v137
    %v194 = vunpack.c.h.b16 %v137
    %v195 = vunpack.c.l.b16 %v138
    %v196 = vunpack.c.h.b16 %v138
    %v197 = vunpack.c.l.b16 %v139
    %v198 = vunpack.c.h.b16 %v139
    %v199 = vunpack.c.l.b16 %v140
    %v200 = vunpack.c.h.b16 %v140
    %v201 = vunpack.c.l.b16 %v141
    %v202 = vunpack.c.h.b16 %v141
    %v203 = vunpack.c.l.b16 %v142
    %v204 = vunpack.c.h.b16 %v142
    %v205 = vunpack.c.l.b16 %v143
    %v206 = vunpack.c.h.b16 %v143
    %v207 = vunpack.c.l.b16 %v144
    %v208 = vunpack.c.h.b16 %v144
    %v209 = vunpack.c.l.b16 %v145
    %v210 = vunpack.c.h.b16 %v145
    %v211 = vunpack.c.l.b16 %v146
    %v212 = vunpack.c.h.b16 %v146
    %v213 = vpack.c.b16 %v183, %v181
    %v214 = vpack.c.b16 %v184, %v182
    %v215 = vpack.c.b16 %v187, %v185
    %v216 = vpack.c.b16 %v188, %v186
    %v217 = vpack.c.b16 %v191, %v189
    %v218 = vpack.c.b16 %v192, %v190
    %v219 = vpack.c.b16 %v195, %v193
    %v220 = vpack.c.b16 %v196, %v194
    %v221 = vpack.c.b16 %v199, %v197
    %v222 = vpack.c.b16 %v200, %v198
    %v223 = vpack.c.b16 %v203, %v201
    %v224 = vpack.c.b16 %v204, %v202
    %v225 = vpack.c.b16 %v207, %v205
    %v226 = vpack.c.b16 %v208, %v206
    %v227 = vpack.c.b16 %v211, %v209
    %v228 = vpack.c.b16 %v212, %v210
    %245 = vmatprep.subr.bf16.mxu0 %v214
    %246 = vmatpush1.bf16.msra.mxu0 %v213
    %247 = vmatprep.subr.bf16.mxu0 %v216
    %248 = vmatpush1.bf16.msra.mxu0 %v215
    %249 = vmatprep.subr.bf16.mxu0 %v218
    %250 = vmatpush1.bf16.msra.mxu0 %v217
    %251 = vmatprep.subr.bf16.mxu0 %v220
    %252 = vmatpush1.bf16.msra.mxu0 %v219
    %253 = vmatprep.subr.bf16.mxu0 %v222
    %254 = vmatpush1.bf16.msra.mxu0 %v221
    %255 = vmatprep.subr.bf16.mxu0 %v224
    %256 = vmatpush1.bf16.msra.mxu0 %v223
    %257 = vmatprep.subr.bf16.mxu0 %v226
    %258 = vmatpush1.bf16.msra.mxu0 %v225
    %259 = vmatprep.subr.bf16.mxu0 %v228
    %260 = vmatpush1.bf16.msra.mxu0 %v227
    %261 = vmatprep.subr.bf16.mxu0 0
    %262 = vmatpush1.bf16.msra.mxu0 0
    %263 = vmatprep.subr.bf16.mxu0 0
    %264 = vmatpush1.bf16.msra.mxu0 0
    %265 = vmatprep.subr.bf16.mxu0 0
    %266 = vmatpush1.bf16.msra.mxu0 0
    %267 = vmatprep.subr.bf16.mxu0 0
    %268 = vmatpush1.bf16.msra.mxu0 0
    %269 = vmatprep.subr.bf16.mxu0 0
    %270 = vmatpush1.bf16.msra.mxu0 0
    %271 = vmatprep.subr.bf16.mxu0 0
    %272 = vmatpush1.bf16.msra.mxu0 0
    %273 = vmatprep.subr.bf16.mxu0 0
    %274 = vmatpush1.bf16.msra.mxu0 0
    %275 = vmatprep.subr.bf16.mxu0 0
    %276 = vmatpush1.bf16.msra.mxu0 0
    %277 = vmatprep.mubr.bf16.mxu0 0
    %278 = vmatmul.mubr.bf16.gmra.mrb[0].mxu0 %v163
    %v279 = vpop.f32.mrb[0].mxu0
    %v280 = vadd.f32 %v152, %v279
    %v281 = vpop.f32.mrb[0].mxu0
    %v282 = vadd.f32 %v156, %v281
    %v283 = vpop.f32.mrb[0].mxu0
    %v284 = vadd.f32 %v152, %v283
    %v285 = vpop.f32.mrb[0].mxu0
    %v286 = vadd.f32 %v156, %v285
    %287 = vdwg.mxu0
    %v288 = vpack.c.bf16 %v284, %v280
    %v289 = vpack.c.bf16 %v286, %v282
    %v290 = vmax.bf16 %v288, 0
    %v291 = vmax.bf16 %v289, 0
    %v292 = vld [vmem:[#allocation4] sm:$0xf]
    %v293 = vld [vmem:[#allocation4 + $0x4] sm:$0xf]
    %v294 = vld [vmem:[#allocation4 + $0x8] sm:$0xf]
    %v295 = vld [vmem:[#allocation4 + $0xc] sm:$0xf]
    %v296 = vld [vmem:[#allocation4 + $0x10] sm:$0xf]
    %v297 = vld [vmem:[#allocation4 + $0x14] sm:$0xf]
    %v298 = vld [vmem:[#allocation4 + $0x18] sm:$0xf]
    %v299 = vld [vmem:[#allocation4 + $0x1c] sm:$0xf]
    %v300 = vld [vmem:[#allocation4 + $0x20] sm:$0xf]
    %v301 = vld [vmem:[#allocation4 + $0x24] sm:$0xf]
    %v302 = vld [vmem:[#allocation4 + $0x28] sm:$0xf]
    %v303 = vld [vmem:[#allocation4 + $0x2c] sm:$0xf]
    %v304 = vld [vmem:[#allocation4 + $0x30] sm:$0xf]
    %v305 = vld [vmem:[#allocation4 + $0x34] sm:$0xf]
    %v306 = vld [vmem:[#allocation4 + $0x38] sm:$0xf]
    %v307 = vld [vmem:[#allocation4 + $0x3c] sm:$0xf]
    %v308 = vld [vmem:[#allocation4 + $0x40] sm:$0xf]
    %v309 = vld [vmem:[#allocation4 + $0x44] sm:$0xf]
    %v310 = vld [vmem:[#allocation4 + $0x48] sm:$0xf]
    %v311 = vld [vmem:[#allocation4 + $0x4c] sm:$0xf]
    %v312 = vld [vmem:[#allocation4 + $0x50] sm:$0xf]
    %v313 = vld [vmem:[#allocation4 + $0x54] sm:$0xf]
    %v314 = vld [vmem:[#allocation4 + $0x58] sm:$0xf]
    %v315 = vld [vmem:[#allocation4 + $0x5c] sm:$0xf]
    %v316 = vld [vmem:[#allocation4 + $0x60] sm:$0xf]
    %v317 = vld [vmem:[#allocation4 + $0x64] sm:$0xf]
    %v318 = vld [vmem:[#allocation4 + $0x68] sm:$0xf]
    %v319 = vld [vmem:[#allocation4 + $0x6c] sm:$0xf]
    %v320 = vld [vmem:[#allocation4 + $0x70] sm:$0xf]
    %v321 = vld [vmem:[#allocation4 + $0x74] sm:$0xf]
    %v322 = vld [vmem:[#allocation4 + $0x78] sm:$0xf]
    %v323 = vld [vmem:[#allocation4 + $0x7c] sm:$0xf]
    %v324 = vld [vmem:[%s4] sm:$0x1]
    %v326 = vlaneseq
    %v327 = vshrl.u32 %v326, 7
    %v328 = vsub.s32 0, %v327
    %v329 = vrot.slane %v324, %v328
    %v363 = vunpack.c.l.b16 %v292
    %v364 = vunpack.c.l.b16 %v293
    %v365 = vunpack.c.l.b16 %v294
    %v366 = vunpack.c.l.b16 %v295
    %v367 = vunpack.c.l.b16 %v296
    %v368 = vunpack.c.l.b16 %v297
    %v369 = vunpack.c.l.b16 %v298
    %v370 = vunpack.c.l.b16 %v299
    %v371 = vunpack.c.l.b16 %v300
    %v372 = vunpack.c.l.b16 %v301
    %v373 = vunpack.c.l.b16 %v302
    %v374 = vunpack.c.l.b16 %v303
    %v375 = vunpack.c.l.b16 %v304
    %v376 = vunpack.c.l.b16 %v305
    %v377 = vunpack.c.l.b16 %v306
    %v378 = vunpack.c.l.b16 %v307
    %v379 = vunpack.c.l.b16 %v308
    %v380 = vunpack.c.l.b16 %v309
    %v381 = vunpack.c.l.b16 %v310
    %v382 = vunpack.c.l.b16 %v311
    %v383 = vunpack.c.l.b16 %v312
    %v384 = vunpack.c.l.b16 %v313
    %v385 = vunpack.c.l.b16 %v314
    %v386 = vunpack.c.l.b16 %v315
    %v387 = vunpack.c.l.b16 %v316
    %v388 = vunpack.c.l.b16 %v317
    %v389 = vunpack.c.l.b16 %v318
    %v390 = vunpack.c.l.b16 %v319
    %v391 = vunpack.c.l.b16 %v320
    %v392 = vunpack.c.l.b16 %v321
    %v393 = vunpack.c.l.b16 %v322
    %v394 = vunpack.c.l.b16 %v323
    %v395 = vpack.c.b16 %v364, %v363
    %v396 = vpack.c.b16 %v366, %v365
    %v397 = vpack.c.b16 %v368, %v367
    %v398 = vpack.c.b16 %v370, %v369
    %v399 = vpack.c.b16 %v372, %v371
    %v400 = vpack.c.b16 %v374, %v373
    %v401 = vpack.c.b16 %v376, %v375
    %v402 = vpack.c.b16 %v378, %v377
    %v403 = vpack.c.b16 %v380, %v379
    %v404 = vpack.c.b16 %v382, %v381
    %v405 = vpack.c.b16 %v384, %v383
    %v406 = vpack.c.b16 %v386, %v385
    %v407 = vpack.c.b16 %v388, %v387
    %v408 = vpack.c.b16 %v390, %v389
    %v409 = vpack.c.b16 %v392, %v391
    %v410 = vpack.c.b16 %v394, %v393
    %427 = vmatprep.subr.bf16.mxu0 0
    %428 = vmatpush1.bf16.msra.mxu0 %v395
    %429 = vmatprep.subr.bf16.mxu0 0
    %430 = vmatpush1.bf16.msra.mxu0 %v396
    %431 = vmatprep.subr.bf16.mxu0 0
    %432 = vmatpush1.bf16.msra.mxu0 %v397
    %433 = vmatprep.subr.bf16.mxu0 0
    %434 = vmatpush1.bf16.msra.mxu0 %v398
    %435 = vmatprep.subr.bf16.mxu0 0
    %436 = vmatpush1.bf16.msra.mxu0 %v399
    %437 = vmatprep.subr.bf16.mxu0 0
    %438 = vmatpush1.bf16.msra.mxu0 %v400
    %439 = vmatprep.subr.bf16.mxu0 0
    %440 = vmatpush1.bf16.msra.mxu0 %v401
    %441 = vmatprep.subr.bf16.mxu0 0
    %442 = vmatpush1.bf16.msra.mxu0 %v402
    %443 = vmatprep.subr.bf16.mxu0 0
    %444 = vmatpush1.bf16.msra.mxu0 %v403
    %445 = vmatprep.subr.bf16.mxu0 0
    %446 = vmatpush1.bf16.msra.mxu0 %v404
    %447 = vmatprep.subr.bf16.mxu0 0
    %448 = vmatpush1.bf16.msra.mxu0 %v405
    %449 = vmatprep.subr.bf16.mxu0 0
    %450 = vmatpush1.bf16.msra.mxu0 %v406
    %451 = vmatprep.subr.bf16.mxu0 0
    %452 = vmatpush1.bf16.msra.mxu0 %v407
    %453 = vmatprep.subr.bf16.mxu0 0
    %454 = vmatpush1.bf16.msra.mxu0 %v408
    %455 = vmatprep.subr.bf16.mxu0 0
    %456 = vmatpush1.bf16.msra.mxu0 %v409
    %457 = vmatprep.subr.bf16.mxu0 0
    %458 = vmatpush1.bf16.msra.mxu0 %v410
    %459 = vmatprep.mubr.bf16.mxu0 %v291
    %460 = vmatmul.mubr.bf16.gmra.mrb[0].mxu0 %v290
    %v461 = vpop.f32.mrb[0].mxu0
    %v462 = vadd.f32 %v329, %v461
    %v463 = vpop.f32.mrb[0].mxu0
    %v464 = vpop.f32.mrb[0].mxu0
    %v465 = vadd.f32 %v329, %v464
    %v466 = vpop.f32.mrb[0].mxu0
    %467 = vdwg.mxu0
    %v468 = vpack.c.bf16 %v465, %v462
    %v469 = vmax.bf16 %v468, 0
    %v470 = vld [vmem:[#allocation6] sm:$0xf]
    %v471 = vld [vmem:[#allocation6 + $0x4] sm:$0xf]
    %v472 = vld [vmem:[#allocation6 + $0x8] sm:$0xf]
    %v473 = vld [vmem:[#allocation6 + $0xc] sm:$0xf]
    %v474 = vld [vmem:[#allocation6 + $0x10] sm:$0xf]
    %v475 = vld [vmem:[#allocation6 + $0x14] sm:$0xf]
    %v476 = vld [vmem:[#allocation6 + $0x18] sm:$0xf]
    %v477 = vld [vmem:[#allocation6 + $0x1c] sm:$0xf]
    %v478 = vld [vmem:[#allocation6 + $0x20] sm:$0xf]
    %v479 = vld [vmem:[#allocation6 + $0x24] sm:$0xf]
    %v480 = vld [vmem:[#allocation6 + $0x28] sm:$0xf]
    %v481 = vld [vmem:[#allocation6 + $0x2c] sm:$0xf]
    %v482 = vld [vmem:[#allocation6 + $0x30] sm:$0xf]
    %v483 = vld [vmem:[#allocation6 + $0x34] sm:$0xf]
    %v484 = vld [vmem:[#allocation6 + $0x38] sm:$0xf]
    %v485 = vld [vmem:[#allocation6 + $0x3c] sm:$0xf]
    %v486 = vld [vmem:[%s6] sm:$0x1]
    %v488 = vlaneseq
    %v489 = vshrl.u32 %v488, 7
    %v490 = vsub.s32 0, %v489
    %v491 = vrot.slane %v486, %v490
    %v509 = vunpack.c.l.b16 %v470
    %v510 = vunpack.c.l.b16 %v471
    %v511 = vunpack.c.l.b16 %v472
    %v512 = vunpack.c.l.b16 %v473
    %v513 = vunpack.c.l.b16 %v474
    %v514 = vunpack.c.l.b16 %v475
    %v515 = vunpack.c.l.b16 %v476
    %v516 = vunpack.c.l.b16 %v477
    %v517 = vunpack.c.l.b16 %v478
    %v518 = vunpack.c.l.b16 %v479
    %v519 = vunpack.c.l.b16 %v480
    %v520 = vunpack.c.l.b16 %v481
    %v521 = vunpack.c.l.b16 %v482
    %v522 = vunpack.c.l.b16 %v483
    %v523 = vunpack.c.l.b16 %v484
    %v524 = vunpack.c.l.b16 %v485
    %v525 = vpack.c.b16 %v510, %v509
    %v526 = vpack.c.b16 %v512, %v511
    %v527 = vpack.c.b16 %v514, %v513
    %v528 = vpack.c.b16 %v516, %v515
    %v529 = vpack.c.b16 %v518, %v517
    %v530 = vpack.c.b16 %v520, %v519
    %v531 = vpack.c.b16 %v522, %v521
    %v532 = vpack.c.b16 %v524, %v523
    %541 = vmatprep.subr.bf16.mxu0 0
    %542 = vmatpush1.bf16.msra.mxu0 %v525
    %543 = vmatprep.subr.bf16.mxu0 0
    %544 = vmatpush1.bf16.msra.mxu0 %v526
    %545 = vmatprep.subr.bf16.mxu0 0
    %546 = vmatpush1.bf16.msra.mxu0 %v527
    %547 = vmatprep.subr.bf16.mxu0 0
    %548 = vmatpush1.bf16.msra.mxu0 %v528
    %549 = vmatprep.subr.bf16.mxu0 0
    %550 = vmatpush1.bf16.msra.mxu0 %v529
    %551 = vmatprep.subr.bf16.mxu0 0
    %552 = vmatpush1.bf16.msra.mxu0 %v530
    %553 = vmatprep.subr.bf16.mxu0 0
    %554 = vmatpush1.bf16.msra.mxu0 %v531
    %555 = vmatprep.subr.bf16.mxu0 0
    %556 = vmatpush1.bf16.msra.mxu0 %v532
    %557 = vmatprep.subr.bf16.mxu0 0
    %558 = vmatpush1.bf16.msra.mxu0 0
    %559 = vmatprep.subr.bf16.mxu0 0
    %560 = vmatpush1.bf16.msra.mxu0 0
    %561 = vmatprep.subr.bf16.mxu0 0
    %562 = vmatpush1.bf16.msra.mxu0 0
    %563 = vmatprep.subr.bf16.mxu0 0
    %564 = vmatpush1.bf16.msra.mxu0 0
    %565 = vmatprep.subr.bf16.mxu0 0
    %566 = vmatpush1.bf16.msra.mxu0 0
    %567 = vmatprep.subr.bf16.mxu0 0
    %568 = vmatpush1.bf16.msra.mxu0 0
    %569 = vmatprep.subr.bf16.mxu0 0
    %570 = vmatpush1.bf16.msra.mxu0 0
    %571 = vmatprep.subr.bf16.mxu0 0
    %572 = vmatpush1.bf16.msra.mxu0 0
    %573 = vmatprep.mubr.bf16.mxu0 0
    %574 = vmatmul.mubr.bf16.gmra.mrb[0].mxu0 %v469
    %v575 = vpop.f32.mrb[0].mxu0
    %v576 = vadd.f32 %v491, %v575
    %v577 = vpop.f32.mrb[0].mxu0
    %v578 = vpop.f32.mrb[0].mxu0
    %v579 = vadd.f32 %v491, %v578
    %v580 = vpop.f32.mrb[0].mxu0
    %581 = vdwg.mxu0
    %v582 = vpack.c.bf16 %v579, %v576
    %v583 = vmax.bf16 %v582, 0
    %v584 = vunpack.c.l.bf16 %v583
    %v585 = vunpack.c.h.bf16 %v583
    %586 = vst [vmem:[%s14] sm:$0xff] %v584
    %587 = vst [vmem:[%s14 + $0x8] sm:$0xff] %v585
    %v588 = vld [vmem:[#allocation7] sm:$0xf]
    %v589 = vld [vmem:[#allocation7 + $0x4] sm:$0xf]
    %v590 = vld [vmem:[#allocation7 + $0x8] sm:$0xf]
    %v591 = vld [vmem:[#allocation7 + $0xc] sm:$0xf]
    %v592 = vld [vmem:[#allocation7 + $0x10] sm:$0xf]
    %v593 = vld [vmem:[#allocation7 + $0x14] sm:$0xf]
    %v594 = vld [vmem:[#allocation7 + $0x18] sm:$0xf]
    %v595 = vld [vmem:[#allocation7 + $0x1c] sm:$0xf]
    %v596 = vld [vmem:[#allocation7 + $0x20] sm:$0xf]
    %v597 = vld [vmem:[#allocation7 + $0x24] sm:$0xf]
    %v598 = vld [vmem:[#allocation7 + $0x28] sm:$0xf]
    %v599 = vld [vmem:[#allocation7 + $0x2c] sm:$0xf]
    %v600 = vld [vmem:[#allocation7 + $0x30] sm:$0xf]
    %v601 = vld [vmem:[#allocation7 + $0x34] sm:$0xf]
    %v602 = vld [vmem:[#allocation7 + $0x38] sm:$0xf]
    %v603 = vld [vmem:[#allocation7 + $0x3c] sm:$0xf]
    %v604 = vld [vmem:[%s8] sm:$0x1]
    %v606 = vlaneseq
    %v607 = vshrl.u32 %v606, 7
    %v608 = vsub.s32 0, %v607
    %v609 = vrot.slane %v604, %v608
    %v627 = vunpack.c.l.b16 %v588
    %v628 = vunpack.c.l.b16 %v589
    %v629 = vunpack.c.l.b16 %v590
    %v630 = vunpack.c.l.b16 %v591
    %v631 = vunpack.c.l.b16 %v592
    %v632 = vunpack.c.l.b16 %v593
    %v633 = vunpack.c.l.b16 %v594
    %v634 = vunpack.c.l.b16 %v595
    %v635 = vunpack.c.l.b16 %v596
    %v636 = vunpack.c.l.b16 %v597
    %v637 = vunpack.c.l.b16 %v598
    %v638 = vunpack.c.l.b16 %v599
    %v639 = vunpack.c.l.b16 %v600
    %v640 = vunpack.c.l.b16 %v601
    %v641 = vunpack.c.l.b16 %v602
    %v642 = vunpack.c.l.b16 %v603
    %v643 = vpack.c.b16 %v628, %v627
    %v644 = vpack.c.b16 %v630, %v629
    %v645 = vpack.c.b16 %v632, %v631
    %v646 = vpack.c.b16 %v634, %v633
    %v647 = vpack.c.b16 %v636, %v635
    %v648 = vpack.c.b16 %v638, %v637
    %v649 = vpack.c.b16 %v640, %v639
    %v650 = vpack.c.b16 %v642, %v641
    %659 = vmatprep.subr.bf16.mxu0 0
    %660 = vmatpush1.bf16.msra.mxu0 %v643
    %661 = vmatprep.subr.bf16.mxu0 0
    %662 = vmatpush1.bf16.msra.mxu0 %v644
    %663 = vmatprep.subr.bf16.mxu0 0
    %664 = vmatpush1.bf16.msra.mxu0 %v645
    %665 = vmatprep.subr.bf16.mxu0 0
    %666 = vmatpush1.bf16.msra.mxu0 %v646
    %667 = vmatprep.subr.bf16.mxu0 0
    %668 = vmatpush1.bf16.msra.mxu0 %v647
    %669 = vmatprep.subr.bf16.mxu0 0
    %670 = vmatpush1.bf16.msra.mxu0 %v648
    %671 = vmatprep.subr.bf16.mxu0 0
    %672 = vmatpush1.bf16.msra.mxu0 %v649
    %673 = vmatprep.subr.bf16.mxu0 0
    %674 = vmatpush1.bf16.msra.mxu0 %v650
    %675 = vmatprep.subr.bf16.mxu0 0
    %676 = vmatpush1.bf16.msra.mxu0 0
    %677 = vmatprep.subr.bf16.mxu0 0
    %678 = vmatpush1.bf16.msra.mxu0 0
    %679 = vmatprep.subr.bf16.mxu0 0
    %680 = vmatpush1.bf16.msra.mxu0 0
    %681 = vmatprep.subr.bf16.mxu0 0
    %682 = vmatpush1.bf16.msra.mxu0 0
    %683 = vmatprep.subr.bf16.mxu0 0
    %684 = vmatpush1.bf16.msra.mxu0 0
    %685 = vmatprep.subr.bf16.mxu0 0
    %686 = vmatpush1.bf16.msra.mxu0 0
    %687 = vmatprep.subr.bf16.mxu0 0
    %688 = vmatpush1.bf16.msra.mxu0 0
    %689 = vmatprep.subr.bf16.mxu0 0
    %690 = vmatpush1.bf16.msra.mxu0 0
    %691 = vmatprep.mubr.bf16.mxu0 0
    %692 = vmatmul.mubr.bf16.gmra.mrb[0].mxu0 %v583
    %v693 = vpop.f32.mrb[0].mxu0
    %v694 = vadd.f32 %v609, %v693
    %v695 = vpop.f32.mrb[0].mxu0
    %v696 = vpop.f32.mrb[0].mxu0
    %v697 = vadd.f32 %v609, %v696
    %v698 = vpop.f32.mrb[0].mxu0
    %699 = vdwg.mxu0
    %v700 = vpack.c.bf16 %v697, %v694
    %v701 = vmax.bf16 %v700, 0
    %v702 = vld [vmem:[#allocation9] sm:$0xff]
    %v703 = vld [vmem:[#allocation9 + $0x8] sm:$0xff]
    %v704 = vld [vmem:[#allocation9 + $0x10] sm:$0xff]
    %v705 = vld [vmem:[#allocation9 + $0x18] sm:$0xff]
    %v706 = vld [vmem:[#allocation9 + $0x20] sm:$0xff]
    %v707 = vld [vmem:[#allocation9 + $0x28] sm:$0xff]
    %v708 = vld [vmem:[#allocation9 + $0x30] sm:$0xff]
    %v709 = vld [vmem:[#allocation9 + $0x38] sm:$0xff]
    %v710 = vld [vmem:[#allocation9 + $0x40] sm:$0xff]
    %v711 = vld [vmem:[#allocation9 + $0x48] sm:$0xff]
    %v712 = vld [vmem:[#allocation9 + $0x50] sm:$0xff]
    %v713 = vld [vmem:[#allocation9 + $0x58] sm:$0xff]
    %v714 = vld [vmem:[#allocation9 + $0x60] sm:$0xff]
    %v715 = vld [vmem:[#allocation9 + $0x68] sm:$0xff]
    %v716 = vld [vmem:[#allocation9 + $0x70] sm:$0xff]
    %v717 = vld [vmem:[#allocation9 + $0x78] sm:$0xff]
    %v718 = vld [vmem:[%s10] sm:$0x3]
    %v720 = vlaneseq
    %v721 = vshrl.u32 %v720, 7
    %v722 = vsub.s32 0, %v721
    %v723 = vrot.slane %v718, %v722
    %v724 = vlaneseq
    %v725 = vshrl.u32 %v724, 7
    %v726 = vsub.s32 1, %v725
    %v727 = vrot.slane %v718, %v726
    %v746 = vunpack.c.l.b16 %v702
    %v747 = vunpack.c.h.b16 %v702
    %v748 = vunpack.c.l.b16 %v703
    %v749 = vunpack.c.h.b16 %v703
    %v750 = vunpack.c.l.b16 %v704
    %v751 = vunpack.c.h.b16 %v704
    %v752 = vunpack.c.l.b16 %v705
    %v753 = vunpack.c.h.b16 %v705
    %v754 = vunpack.c.l.b16 %v706
    %v755 = vunpack.c.h.b16 %v706
    %v756 = vunpack.c.l.b16 %v707
    %v757 = vunpack.c.h.b16 %v707
    %v758 = vunpack.c.l.b16 %v708
    %v759 = vunpack.c.h.b16 %v708
    %v760 = vunpack.c.l.b16 %v709
    %v761 = vunpack.c.h.b16 %v709
    %v762 = vunpack.c.l.b16 %v710
    %v763 = vunpack.c.h.b16 %v710
    %v764 = vunpack.c.l.b16 %v711
    %v765 = vunpack.c.h.b16 %v711
    %v766 = vunpack.c.l.b16 %v712
    %v767 = vunpack.c.h.b16 %v712
    %v768 = vunpack.c.l.b16 %v713
    %v769 = vunpack.c.h.b16 %v713
    %v770 = vunpack.c.l.b16 %v714
    %v771 = vunpack.c.h.b16 %v714
    %v772 = vunpack.c.l.b16 %v715
    %v773 = vunpack.c.h.b16 %v715
    %v774 = vunpack.c.l.b16 %v716
    %v775 = vunpack.c.h.b16 %v716
    %v776 = vunpack.c.l.b16 %v717
    %v777 = vunpack.c.h.b16 %v717
    %v778 = vpack.c.b16 %v748, %v746
    %v779 = vpack.c.b16 %v749, %v747
    %v780 = vpack.c.b16 %v752, %v750
    %v781 = vpack.c.b16 %v753, %v751
    %v782 = vpack.c.b16 %v756, %v754
    %v783 = vpack.c.b16 %v757, %v755
    %v784 = vpack.c.b16 %v760, %v758
    %v785 = vpack.c.b16 %v761, %v759
    %v786 = vpack.c.b16 %v764, %v762
    %v787 = vpack.c.b16 %v765, %v763
    %v788 = vpack.c.b16 %v768, %v766
    %v789 = vpack.c.b16 %v769, %v767
    %v790 = vpack.c.b16 %v772, %v770
    %v791 = vpack.c.b16 %v773, %v771
    %v792 = vpack.c.b16 %v776, %v774
    %v793 = vpack.c.b16 %v777, %v775
    %810 = vmatprep.subr.bf16.mxu0 %v779
    %811 = vmatpush1.bf16.msra.mxu0 %v778
    %812 = vmatprep.subr.bf16.mxu0 %v781
    %813 = vmatpush1.bf16.msra.mxu0 %v780
    %814 = vmatprep.subr.bf16.mxu0 %v783
    %815 = vmatpush1.bf16.msra.mxu0 %v782
    %816 = vmatprep.subr.bf16.mxu0 %v785
    %817 = vmatpush1.bf16.msra.mxu0 %v784
    %818 = vmatprep.subr.bf16.mxu0 %v787
    %819 = vmatpush1.bf16.msra.mxu0 %v786
    %820 = vmatprep.subr.bf16.mxu0 %v789
    %821 = vmatpush1.bf16.msra.mxu0 %v788
    %822 = vmatprep.subr.bf16.mxu0 %v791
    %823 = vmatpush1.bf16.msra.mxu0 %v790
    %824 = vmatprep.subr.bf16.mxu0 %v793
    %825 = vmatpush1.bf16.msra.mxu0 %v792
    %826 = vmatprep.subr.bf16.mxu0 0
    %827 = vmatpush1.bf16.msra.mxu0 0
    %828 = vmatprep.subr.bf16.mxu0 0
    %829 = vmatpush1.bf16.msra.mxu0 0
    %830 = vmatprep.subr.bf16.mxu0 0
    %831 = vmatpush1.bf16.msra.mxu0 0
    %832 = vmatprep.subr.bf16.mxu0 0
    %833 = vmatpush1.bf16.msra.mxu0 0
    %834 = vmatprep.subr.bf16.mxu0 0
    %835 = vmatpush1.bf16.msra.mxu0 0
    %836 = vmatprep.subr.bf16.mxu0 0
    %837 = vmatpush1.bf16.msra.mxu0 0
    %838 = vmatprep.subr.bf16.mxu0 0
    %839 = vmatpush1.bf16.msra.mxu0 0
    %840 = vmatprep.subr.bf16.mxu0 0
    %841 = vmatpush1.bf16.msra.mxu0 0
    %842 = vmatprep.mubr.bf16.mxu0 0
    %843 = vmatmul.mubr.bf16.gmra.mrb[0].mxu0 %v701
    %v844 = vpop.f32.mrb[0].mxu0
    %v845 = vadd.f32 %v723, %v844
    %v846 = vpop.f32.mrb[0].mxu0
    %v847 = vadd.f32 %v727, %v846
    %v848 = vpop.f32.mrb[0].mxu0
    %v849 = vadd.f32 %v723, %v848
    %v850 = vpop.f32.mrb[0].mxu0
    %v851 = vadd.f32 %v727, %v850
    %852 = vdwg.mxu0
    %v853 = vpack.c.bf16 %v849, %v845
    %v854 = vpack.c.bf16 %v851, %v847
    %v855 = vmax.bf16 %v853, 0
    %v856 = vmax.bf16 %v854, 0
    %v857 = vld [vmem:[#allocation10] sm:$0xf]
    %v858 = vld [vmem:[#allocation10 + $0x4] sm:$0xf]
    %v859 = vld [vmem:[#allocation10 + $0x8] sm:$0xf]
    %v860 = vld [vmem:[#allocation10 + $0xc] sm:$0xf]
    %v861 = vld [vmem:[#allocation10 + $0x10] sm:$0xf]
    %v862 = vld [vmem:[#allocation10 + $0x14] sm:$0xf]
    %v863 = vld [vmem:[#allocation10 + $0x18] sm:$0xf]
    %v864 = vld [vmem:[#allocation10 + $0x1c] sm:$0xf]
    %v865 = vld [vmem:[#allocation10 + $0x20] sm:$0xf]
    %v866 = vld [vmem:[#allocation10 + $0x24] sm:$0xf]
    %v867 = vld [vmem:[#allocation10 + $0x28] sm:$0xf]
    %v868 = vld [vmem:[#allocation10 + $0x2c] sm:$0xf]
    %v869 = vld [vmem:[#allocation10 + $0x30] sm:$0xf]
    %v870 = vld [vmem:[#allocation10 + $0x34] sm:$0xf]
    %v871 = vld [vmem:[#allocation10 + $0x38] sm:$0xf]
    %v872 = vld [vmem:[#allocation10 + $0x3c] sm:$0xf]
    %v873 = vld [vmem:[#allocation10 + $0x40] sm:$0xf]
    %v874 = vld [vmem:[#allocation10 + $0x44] sm:$0xf]
    %v875 = vld [vmem:[#allocation10 + $0x48] sm:$0xf]
    %v876 = vld [vmem:[#allocation10 + $0x4c] sm:$0xf]
    %v877 = vld [vmem:[#allocation10 + $0x50] sm:$0xf]
    %v878 = vld [vmem:[#allocation10 + $0x54] sm:$0xf]
    %v879 = vld [vmem:[#allocation10 + $0x58] sm:$0xf]
    %v880 = vld [vmem:[#allocation10 + $0x5c] sm:$0xf]
    %v881 = vld [vmem:[#allocation10 + $0x60] sm:$0xf]
    %v882 = vld [vmem:[#allocation10 + $0x64] sm:$0xf]
    %v883 = vld [vmem:[#allocation10 + $0x68] sm:$0xf]
    %v884 = vld [vmem:[#allocation10 + $0x6c] sm:$0xf]
    %v885 = vld [vmem:[#allocation10 + $0x70] sm:$0xf]
    %v886 = vld [vmem:[#allocation10 + $0x74] sm:$0xf]
    %v887 = vld [vmem:[#allocation10 + $0x78] sm:$0xf]
    %v888 = vld [vmem:[#allocation10 + $0x7c] sm:$0xf]
    %v889 = vld [vmem:[%s12] sm:$0x1]
    %v891 = vlaneseq
    %v892 = vshrl.u32 %v891, 7
    %v893 = vsub.s32 0, %v892
    %v894 = vrot.slane %v889, %v893
    %v928 = vunpack.c.l.b16 %v857
    %v929 = vunpack.c.l.b16 %v858
    %v930 = vunpack.c.l.b16 %v859
    %v931 = vunpack.c.l.b16 %v860
    %v932 = vunpack.c.l.b16 %v861
    %v933 = vunpack.c.l.b16 %v862
    %v934 = vunpack.c.l.b16 %v863
    %v935 = vunpack.c.l.b16 %v864
    %v936 = vunpack.c.l.b16 %v865
    %v937 = vunpack.c.l.b16 %v866
    %v938 = vunpack.c.l.b16 %v867
    %v939 = vunpack.c.l.b16 %v868
    %v940 = vunpack.c.l.b16 %v869
    %v941 = vunpack.c.l.b16 %v870
    %v942 = vunpack.c.l.b16 %v871
    %v943 = vunpack.c.l.b16 %v872
    %v944 = vunpack.c.l.b16 %v873
    %v945 = vunpack.c.l.b16 %v874
    %v946 = vunpack.c.l.b16 %v875
    %v947 = vunpack.c.l.b16 %v876
    %v948 = vunpack.c.l.b16 %v877
    %v949 = vunpack.c.l.b16 %v878
    %v950 = vunpack.c.l.b16 %v879
    %v951 = vunpack.c.l.b16 %v880
    %v952 = vunpack.c.l.b16 %v881
    %v953 = vunpack.c.l.b16 %v882
    %v954 = vunpack.c.l.b16 %v883
    %v955 = vunpack.c.l.b16 %v884
    %v956 = vunpack.c.l.b16 %v885
    %v957 = vunpack.c.l.b16 %v886
    %v958 = vunpack.c.l.b16 %v887
    %v959 = vunpack.c.l.b16 %v888
    %v960 = vpack.c.b16 %v929, %v928
    %v961 = vpack.c.b16 %v931, %v930
    %v962 = vpack.c.b16 %v933, %v932
    %v963 = vpack.c.b16 %v935, %v934
    %v964 = vpack.c.b16 %v937, %v936
    %v965 = vpack.c.b16 %v939, %v938
    %v966 = vpack.c.b16 %v941, %v940
    %v967 = vpack.c.b16 %v943, %v942
    %v968 = vpack.c.b16 %v945, %v944
    %v969 = vpack.c.b16 %v947, %v946
    %v970 = vpack.c.b16 %v949, %v948
    %v971 = vpack.c.b16 %v951, %v950
    %v972 = vpack.c.b16 %v953, %v952
    %v973 = vpack.c.b16 %v955, %v954
    %v974 = vpack.c.b16 %v957, %v956
    %v975 = vpack.c.b16 %v959, %v958
    %992 = vmatprep.subr.bf16.mxu0 0
    %993 = vmatpush1.bf16.msra.mxu0 %v960
    %994 = vmatprep.subr.bf16.mxu0 0
    %995 = vmatpush1.bf16.msra.mxu0 %v961
    %996 = vmatprep.subr.bf16.mxu0 0
    %997 = vmatpush1.bf16.msra.mxu0 %v962
    %998 = vmatprep.subr.bf16.mxu0 0
    %999 = vmatpush1.bf16.msra.mxu0 %v963
    %1000 = vmatprep.subr.bf16.mxu0 0
    %1001 = vmatpush1.bf16.msra.mxu0 %v964
    %1002 = vmatprep.subr.bf16.mxu0 0
    %1003 = vmatpush1.bf16.msra.mxu0 %v965
    %1004 = vmatprep.subr.bf16.mxu0 0
    %1005 = vmatpush1.bf16.msra.mxu0 %v966
    %1006 = vmatprep.subr.bf16.mxu0 0
    %1007 = vmatpush1.bf16.msra.mxu0 %v967
    %1008 = vmatprep.subr.bf16.mxu0 0
    %1009 = vmatpush1.bf16.msra.mxu0 %v968
    %1010 = vmatprep.subr.bf16.mxu0 0
    %1011 = vmatpush1.bf16.msra.mxu0 %v969
    %1012 = vmatprep.subr.bf16.mxu0 0
    %1013 = vmatpush1.bf16.msra.mxu0 %v970
    %1014 = vmatprep.subr.bf16.mxu0 0
    %1015 = vmatpush1.bf16.msra.mxu0 %v971
    %1016 = vmatprep.subr.bf16.mxu0 0
    %1017 = vmatpush1.bf16.msra.mxu0 %v972
    %1018 = vmatprep.subr.bf16.mxu0 0
    %1019 = vmatpush1.bf16.msra.mxu0 %v973
    %1020 = vmatprep.subr.bf16.mxu0 0
    %1021 = vmatpush1.bf16.msra.mxu0 %v974
    %1022 = vmatprep.subr.bf16.mxu0 0
    %1023 = vmatpush1.bf16.msra.mxu0 %v975
    %1024 = vmatprep.mubr.bf16.mxu0 %v856
    %1025 = vmatmul.mubr.bf16.gmra.mrb[0].mxu0 %v855
    %v1026 = vpop.f32.mrb[0].mxu0
    %v1027 = vadd.f32 %v894, %v1026
    %v1028 = vpop.f32.mrb[0].mxu0
    %v1029 = vpop.f32.mrb[0].mxu0
    %v1030 = vadd.f32 %v894, %v1029
    %v1031 = vpop.f32.mrb[0].mxu0
    %1032 = vdwg.mxu0
    %v1033 = vxor.u32 %v1027, 2147483648
    %v1034 = vxor.u32 %v1030, 2147483648
    %v1035 = vmul.f32 %v1033, 1.442695
    %v1036 = vpow.pop %v1035
    %v1037 = vmul.f32 %v1034, 1.442695
    %v1038 = vpow.pop %v1037
    %v1039 = vadd.f32 %v1036, 1.0
    %v1040 = vadd.f32 %v1038, 1.0
    %v1041 = vrcp.pop %v1039
    %v1042 = vmul.f32 1.0, %v1041
    %v1043 = vrcp.pop %v1040
    %v1044 = vmul.f32 1.0, %v1043
    %1045 = vst [vmem:[%s13] sm:$0xff] %v1042
    %1046 = vst [vmem:[%s13 + $0x8] sm:$0xff] %v1044
    // Predicated region
    $region78: #{anomaly_detector_forward.1} parent=1 // pred_check
      _
    $region79: #{anomaly_detector_forward.1} parent=1 // pred_check_branch
      %1048 = sbr.rel (0) target = $region81
    $region80: #{anomaly_detector_forward.1} parent=1 // pred_region
      _
    $region81: #{anomaly_detector_forward.1} parent=1 // pred_fallthru
      _
    // Predicated region
    $region82: #{anomaly_detector_forward.1} parent=1 // pred_check
      _
    $region83: #{anomaly_detector_forward.1} parent=1 // pred_check_branch
      %1050 = sbr.rel (0) target = $region85
    $region84: #{anomaly_detector_forward.1} parent=1 // pred_region
      _
    $region85: #{anomaly_detector_forward.1} parent=1 // pred_fallthru
      _
    // Predicated region
    $region86: #{anomaly_detector_forward.1} parent=1 // pred_check
      _
    $region87: #{anomaly_detector_forward.1} parent=1 // pred_check_branch
      %1052 = sbr.rel (0) target = $region89
    $region88: #{anomaly_detector_forward.1} parent=1 // pred_region
      _
    $region89: #{anomaly_detector_forward.1} parent=1 // pred_fallthru
      _
    // Predicated region
    $region90: #{anomaly_detector_forward.1} parent=1 // pred_check
      _
    $region91: #{anomaly_detector_forward.1} parent=1 // pred_check_branch
      %1054 = sbr.rel (0) target = $region93
    $region92: #{anomaly_detector_forward.1} parent=1 // pred_region
      _
    $region93: #{anomaly_detector_forward.1} parent=1 // pred_fallthru
      _
    %1055 = vsyncpa [#allocation3], 1
    %1056 = vsyncpa [#allocation5], 1
    %1057 = vsyncpa [#allocation8], 1
    %1058 = vsyncpa [#allocation11], 1

</llo_original>
